<compile_context>
chip_gen: v5e
topology: v5e:2x2
jax: 0.10.0
libtpu: 0.0.40
codegen_flags: <defaults>
</compile_context>

<pallas_src>
import functools

import jax
import jax.numpy as jnp
from jax.experimental import pallas as pl
from jax.experimental.pallas import tpu as pltpu

_EPS = 1e-12


def _cdiv(a, b):
    return (a + b - 1) // b


def _round_up(x, k):
    return ((x + k - 1) // k) * k


def _vmem_capacity_bytes():
    try:
        return int(pltpu.get_tpu_info().vmem_capacity_bytes)
    except Exception:
        return 64 * 1024 * 1024            # conservative (v7x-sized) fallback


def _num_tensorcores():
    """TensorCores reachable by one pallas_call via 'parallel' grid axes."""
    try:
        kind = jax.devices()[0].device_kind.lower()
    except Exception:
        return 1
    if ("lite" in kind) or ("v5e" in kind) or ("v6" in kind):
        return 1                            # v5e / v6e: single TensorCore
    if ("v4" in kind) or ("v5p" in kind) or ("v7" in kind):
        return 2                            # megacore: 2 TCs share the grid
    return 1


def _vmem_bytes_estimate(n, d, tile_m, s_itemsize, mask_itemsize,
                         stream_bufs, anchor_bufs, a_itemsize, nc):
    # Streamed (pipelined) tiles.
    stream = stream_bufs * tile_m * (s_itemsize * d + mask_itemsize * n)
    # Resident anchor block.
    resident = anchor_bufs * a_itemsize * n * d
    # In-kernel f32 temporaries: up-cast sample tile [D,TM], sim [N,TM],
    # f32 mask up-cast [N,TM], plus a few [1,TM] rows (exp / iota / where).
    interm = 4 * tile_m * (d + 2 * n + 8)
    # Partial outputs (double-buffered, tiny).
    outs = 2 * 4 * nc * (n + 2)
    return stream + resident + interm + outs


def _infonce_kernel(a_ref, st_ref, m_ref, num_ref, den_ref, *,
                    tile_m, tiles_per_core, m_valid, mask_padded_cols):
    """Per (core-split c, M-tile j) step: accumulate partial num / den sums."""
    j = pl.program_id(1)                               # M-tile (reduction) index

    @pl.when(j == 0)
    def _init():
        num_ref[...] = jnp.zeros_like(num_ref)
        den_ref[...] = jnp.zeros_like(den_ref)

    # Per-column L2 normalization of the sample tile: f32 sum-of-squares + rsqrt.
    st = st_ref[...]                                   # [D, TM] compute dtype
    stf = st.astype(jnp.float32)
    ssq = jnp.sum(stf * stf, axis=0, keepdims=True)    # [1, TM] f32
    st = st * jax.lax.rsqrt(jnp.maximum(ssq, _EPS * _EPS)).astype(st.dtype)

    # MXU: [N, D] @ [D, TM]  (NN form, lane-dense RHS).  1/tau is folded into a_ref.
    sim = jnp.dot(a_ref[...], st, preferred_element_type=jnp.float32)   # [N, TM]

    # torch.max(sim, dim=0, keepdim=True) -- identity when N == 1, so unconditional.
    exp_sim = jnp.exp(jnp.max(sim, axis=0, keepdims=True))              # [1, TM]

    if mask_padded_cols:
        # Emitted only when the global M range was padded; zeroes every padded
        # column in whichever tile/core contains it.
        col0 = (pl.program_id(0) * tiles_per_core + j) * tile_m
        col = col0 + jax.lax.broadcasted_iota(jnp.int32, exp_sim.shape, 1)
        exp_sim = jnp.where(col < m_valid, exp_sim, 0.0)

    # num / den partial sums on the VPU (general pos_mask values; avoids an f32
    # multi-pass MXU matvec).  For guaranteed-binary masks this could become
    # jnp.where(mask != 0, exp_sim, 0) and skip the f32 up-cast.
    mask = m_ref[...].astype(jnp.float32)              # [N, TM]
    num_p = jnp.sum(mask * exp_sim, axis=1, keepdims=True)   # [N, 1]
    den_p = jnp.sum(exp_sim, axis=1, keepdims=True)          # [1, 1]
    num_ref[...] += num_p.reshape(num_ref.shape)
    den_ref[...] += den_p.reshape(den_ref.shape)


def infonce_pallas(anchor, sample, pos_mask, tau, *, tile_m=None,
                   num_core_splits=None, compute_dtype=jnp.bfloat16):
    """InfoNCE loss.  anchor:[N,D], sample:[M,D], pos_mask:[N,M] -> scalar.

    pos_mask may be int8/bool (recommended: less HBM traffic) or float.
    compute_dtype=bfloat16 (default) streams `sample` in bf16 and runs the MXU
    in bf16 with f32 accumulation; pass jnp.float32 for tight-f32 numerics.
    """
    n, d = anchor.shape
    m, d2 = sample.shape
    assert d == d2 and pos_mask.shape == (n, m)
    cd = jnp.dtype(compute_dtype)
    inv_tau = 1.0 / float(tau)

    # ---- chip-aware sizing --------------------------------------------------
    vmem_bytes = _vmem_capacity_bytes()                 # 128 MiB v5e/v6e, 64 MiB v7x
    vmem_limit = min(int(vmem_bytes * 0.75), 100 * 1024 * 1024)
    budget = int(vmem_limit * 0.6)                      # headroom for compiler scratch
    mask_isz = jnp.dtype(pos_mask.dtype).itemsize
    s_isz = cd.itemsize

    def est(tm, bufs):
        # Conservative: assume double-buffered anchor and 2 core splits.
        return _vmem_bytes_estimate(n, d, tm, s_isz, mask_isz,
                                    stream_bufs=bufs, anchor_bufs=2,
                                    a_itemsize=cd.itemsize, nc=2)

    if tile_m is None:
        tile_m = min(2048, _round_up(max(m, 1), 128))   # prefer 512..2048-wide tiles
        while tile_m > 128 and est(tile_m, 2) > budget:
            tile_m -= 128
    if est(tile_m, 2) > budget:
        # TODO(synk): tile along N (flash-style running accumulators) when the
        # resident anchor / pos_mask rows alone exceed the VMEM budget (v7x: 64 MiB).
        raise ValueError(
            f"InfoNCE Pallas kernel does not fit VMEM even at tile_m={tile_m} "
            f"(N={n}, D={d}, budget={budget} bytes); N-tiling not implemented.")

    n_tiles = _cdiv(m, tile_m)
    nc = _num_tensorcores() if num_core_splits is None else int(num_core_splits)
    nc = max(1, min(nc, n_tiles))                       # 1 on v5e/v6e, up to 2 on v7x
    tiles_per_core = _cdiv(n_tiles, nc)
    m_pad = nc * tiles_per_core * tile_m
    stream_bufs = 3 if (nc * tiles_per_core >= 3 and est(tile_m, 3) <= budget) else 2

    # ---- hoisted anchor normalization (f32, once) with 1/tau folded in ------
    a32 = anchor.astype(jnp.float32)
    inv_norm = jax.lax.rsqrt(
        jnp.maximum(jnp.sum(a32 * a32, axis=1, keepdims=True), _EPS * _EPS))
    a_n = (a32 * (inv_norm * inv_tau)).astype(cd)

    # ---- lane-dense RHS [D, M]; compute-dtype downcast fused into the transpose
    # TODO(synk): if the producer can emit `sample` already as [D, M] in the
    # compute dtype, this transpose pass (extra HBM read+write) disappears.
    s_t = sample.astype(cd).T
    if m_pad != m:
        s_t = jnp.pad(s_t, ((0, 0), (0, m_pad - m)))
        pos_mask = jnp.pad(pos_mask, ((0, 0), (0, m_pad - m)))

    kernel = functools.partial(
        _infonce_kernel, tile_m=tile_m, tiles_per_core=tiles_per_core,
        m_valid=m, mask_padded_cols=(m_pad != m))

    out_specs = [
        pl.BlockSpec((1, n, 1), lambda c, j: (c, 0, 0)),   # per-core num[N]
        pl.BlockSpec((1, 1, 1), lambda c, j: (c, 0, 0)),   # per-core den
    ]
    out_shape = [
        jax.ShapeDtypeStruct((nc, n, 1), jnp.float32),
        jax.ShapeDtypeStruct((nc, 1, 1), jnp.float32),
    ]
    cparams = pltpu.CompilerParams(
        dimension_semantics=("parallel", "arbitrary"),
        vmem_limit_bytes=vmem_limit)

    def call(use_pipeline_mode):
        if use_pipeline_mode:
            in_specs = [
                # Anchor block index is constant -> never re-DMA'd; a single
                # buffer halves its footprint (matters on v7x's 64 MiB VMEM).
                pl.BlockSpec((n, d), lambda c, j: (0, 0),
                             pipeline_mode=pl.Buffered(1)),
                pl.BlockSpec((d, tile_m), lambda c, j: (0, c * tiles_per_core + j),
                             pipeline_mode=pl.Buffered(stream_bufs)),
                pl.BlockSpec((n, tile_m), lambda c, j: (0, c * tiles_per_core + j),
                             pipeline_mode=pl.Buffered(stream_bufs)),
            ]
        else:
            in_specs = [
                pl.BlockSpec((n, d), lambda c, j: (0, 0)),
                pl.BlockSpec((d, tile_m), lambda c, j: (0, c * tiles_per_core + j)),
                pl.BlockSpec((n, tile_m), lambda c, j: (0, c * tiles_per_core + j)),
            ]
        return pl.pallas_call(
            kernel, grid=(nc, tiles_per_core),
            in_specs=in_specs, out_specs=out_specs, out_shape=out_shape,
            compiler_params=cparams)(a_n, s_t, pos_mask)

    try:
        num_part, den_part = call(True)
    except Exception:
        # Fallback for Pallas versions without BlockSpec(pipeline_mode=...).
        num_part, den_part = call(False)

    # Tiny epilogue in XLA: combine per-core partials, take logs, mean.
    num = jnp.sum(num_part[:, :, 0], axis=0)            # [N]
    den = jnp.sum(den_part)                              # scalar (torch row broadcast)
    loss = jnp.log(num) - jnp.log(den)                   # [N]
    return -jnp.mean(loss)


def infonce_ref(anchor, sample, pos_mask, tau):
    """Pure-JAX reference mirroring the PyTorch module."""
    eps = 1e-12
    a = anchor / jnp.maximum(jnp.linalg.norm(anchor, axis=1, keepdims=True), eps)
    s = sample / jnp.maximum(jnp.linalg.norm(sample, axis=1, keepdims=True), eps)
    sim = (a @ s.T) / tau
    if anchor.shape[0] > 1:
        sim = jnp.max(sim, axis=0, keepdims=True)
    exp_sim = jnp.exp(sim)
    loss = jnp.log(jnp.sum(exp_sim * pos_mask, axis=1)) - jnp.log(
        jnp.sum(exp_sim, axis=1))
    return -jnp.mean(loss)


if __name__ == "__main__":
    # Small but non-trivial: M spans several 128-wide lanes (exercises the
    # auto tile sizing, padded-column handling and the accumulator epilogue).
    N, M, D = 8, 520, 32
    TAU = 0.5

    key = jax.random.PRNGKey(0)
    k1, k2, k3 = jax.random.split(key, 3)
    anchor = jax.random.normal(k1, (N, D), dtype=jnp.float32)
    sample = jax.random.normal(k2, (M, D), dtype=jnp.float32)
    # Binary positive mask: diagonal positives plus random extras.
    rand = (jax.random.uniform(k3, (N, M)) < 0.1).astype(jnp.float32)
    pos_mask_f32 = jnp.clip(rand + jnp.eye(N, M, dtype=jnp.float32), 0.0, 1.0)
    pos_mask_i8 = pos_mask_f32.astype(jnp.int8)   # int8 stream -> 4x less HBM traffic

    ref = infonce_ref(anchor, sample, pos_mask_f32, TAU)

    # f32 compute path: numerics match the reference tightly.
    loss_f32 = infonce_pallas(anchor, sample, pos_mask_i8, TAU,
                              compute_dtype=jnp.float32)
    jax.block_until_ready(loss_f32)
    assert jnp.allclose(loss_f32, ref, rtol=1e-4, atol=1e-5), (loss_f32, ref)

    # Default bf16 streaming / MXU path: ~half the HBM traffic; looser tolerance
    # (bf16 perturbs sim by ~0.5% before the exp).
    loss_bf16 = infonce_pallas(anchor, sample, pos_mask_i8, TAU)
    jax.block_until_ready(loss_bf16)
    assert jnp.allclose(loss_bf16, ref, rtol=5e-2, atol=5e-2), (loss_bf16, ref)

    print("KERNEL_OK")
</pallas_src>

<mosaic_0001>
module attributes {stable_mosaic.version = 11 : i64} {
  func.func @_infonce_kernel(%arg0: i32, %arg1: i32, %arg2: memref<8x32xf32, #tpu.memory_space<vmem>>, %arg3: memref<32x640xf32, #tpu.memory_space<vmem>>, %arg4: memref<8x640xi8, #tpu.memory_space<vmem>>, %arg5: memref<1x8x1xf32, #tpu.memory_space<vmem>>, %arg6: memref<1x1x1xf32, #tpu.memory_space<vmem>>) attributes {dimension_semantics = [#tpu.dimension_semantics<parallel>, #tpu.dimension_semantics<arbitrary>], iteration_bounds = array<i64: 1, 1>, scalar_prefetch = 0 : i64, scratch_operands = 0 : i64, tpu.core_type = #tpu.core_type<tc>, window_params = [{pipeline_mode = #tpu.pipeline_mode<synchronous>, transform_indices = @transform_0, window_bounds = array<i64: 8, 32>}, {pipeline_mode = #tpu.pipeline_mode<double_buffered>, transform_indices = @transform_1, window_bounds = array<i64: 32, 640>}, {pipeline_mode = #tpu.pipeline_mode<double_buffered>, transform_indices = @transform_2, window_bounds = array<i64: 8, 640>}, {transform_indices = @transform_3, window_bounds = array<i64: 1, 8, 1>}, {transform_indices = @transform_4, window_bounds = array<i64: 1, 1, 1>}]} {
    %c0_i32 = arith.constant 0 : i32
    %0 = arith.cmpi eq, %arg1, %c0_i32 : i32
    %1 = arith.extui %0 : i1 to i32
    %c0_i32_0 = arith.constant 0 : i32
    %2 = arith.cmpi ne, %1, %c0_i32_0 : i32
    scf.if %2 {
      %cst_24 = arith.constant 0.000000e+00 : f32
      %43 = vector.broadcast %cst_24 : f32 to vector<1x8x1xf32>
      %c0_25 = arith.constant 0 : index
      %c0_26 = arith.constant 0 : index
      %c0_27 = arith.constant 0 : index
      %44 = vector.load %arg5[%c0_25, %c0_26, %c0_27] : memref<1x8x1xf32, #tpu.memory_space<vmem>>, vector<1x8x1xf32>
      tpu.vector_store %arg5[%c0_25, %c0_26, %c0_27], %43 {strides = array<i32>} : memref<1x8x1xf32, #tpu.memory_space<vmem>>, vector<1x8x1xf32>,
      %cst_28 = arith.constant 0.000000e+00 : f32
      %45 = vector.broadcast %cst_28 : f32 to vector<1x1x1xf32>
      %c0_29 = arith.constant 0 : index
      %c0_30 = arith.constant 0 : index
      %c0_31 = arith.constant 0 : index
      %46 = vector.load %arg6[%c0_29, %c0_30, %c0_31] : memref<1x1x1xf32, #tpu.memory_space<vmem>>, vector<1x1x1xf32>
      tpu.vector_store %arg6[%c0_29, %c0_30, %c0_31], %45 {strides = array<i32>} : memref<1x1x1xf32, #tpu.memory_space<vmem>>, vector<1x1x1xf32>,
    } else {
    }
    %c0 = arith.constant 0 : index
    %c0_1 = arith.constant 0 : index
    %3 = vector.load %arg3[%c0, %c0_1] : memref<32x640xf32, #tpu.memory_space<vmem>>, vector<32x640xf32>
    %4 = arith.mulf %3, %3 : vector<32x640xf32>
    %cst = arith.constant dense<0.000000e+00> : vector<640xf32>
    %5 = vector.multi_reduction <add>, %4, %cst [0] : vector<32x640xf32> to vector<640xf32>
    %6 = vector.shape_cast %5 : vector<640xf32> to vector<1x640xf32>
    %cst_2 = arith.constant 1.000000e-24 : f32
    %7 = vector.broadcast %cst_2 : f32 to vector<1x640xf32>
    %8 = arith.maximumf %6, %7 : vector<1x640xf32>
    %9 = math.rsqrt %8 : vector<1x640xf32>
    %10 = vector.broadcast %9 : vector<1x640xf32> to vector<32x640xf32>
    %11 = arith.mulf %3, %10 : vector<32x640xf32>
    %c0_3 = arith.constant 0 : index
    %c0_4 = arith.constant 0 : index
    %12 = vector.load %arg2[%c0_3, %c0_4] : memref<8x32xf32, #tpu.memory_space<vmem>>, vector<8x32xf32>
    %cst_5 = arith.constant dense<0.000000e+00> : vector<8x640xf32>
    %13 = tpu.matmul %12, %11, %cst_5 {dimension_numbers = #tpu.dot_dimension_numbers<[1], [0], [0], [1], [0, 0, 1, 1], [], []>} : vector<8x32xf32>, vector<32x640xf32>, vector<8x640xf32> -> vector<8x640xf32>
    %cst_6 = arith.constant dense<0xFF800000> : vector<640xf32>
    %14 = vector.multi_reduction <maximumf>, %13, %cst_6 [0] : vector<8x640xf32> to vector<640xf32>
    %15 = vector.shape_cast %14 : vector<640xf32> to vector<1x640xf32>
    %16 = math.exp %15 : vector<1x640xf32>
    %c1_i32 = arith.constant 1 : i32
    %17 = arith.muli %arg0, %c1_i32 : i32
    %18 = arith.addi %17, %arg1 : i32
    %c640_i32 = arith.constant 640 : i32
    %19 = arith.muli %18, %c640_i32 : i32
    %20 = tpu.iota {dimensions = array<i32: 1>} : vector<1x640xi32>
    %21 = vector.broadcast %19 : i32 to vector<1x640xi32>
    %22 = arith.addi %21, %20 : vector<1x640xi32>
    %c520_i32 = arith.constant 520 : i32
    %23 = vector.broadcast %c520_i32 : i32 to vector<1x640xi32>
    %24 = arith.cmpi slt, %22, %23 : vector<1x640xi32>
    %cst_7 = arith.constant 0.000000e+00 : f32
    %25 = vector.broadcast %cst_7 : f32 to vector<1x640xf32>
    %26 = arith.select %24, %16, %25 : vector<1x640xi1>, vector<1x640xf32>
    %c0_8 = arith.constant 0 : index
    %c0_9 = arith.constant 0 : index
    %27 = vector.load %arg4[%c0_8, %c0_9] : memref<8x640xi8, #tpu.memory_space<vmem>>, vector<8x640xi8>
    %28 = arith.sitofp %27 : vector<8x640xi8> to vector<8x640xf32>
    %29 = vector.broadcast %26 : vector<1x640xf32> to vector<8x640xf32>
    %30 = arith.mulf %28, %29 : vector<8x640xf32>
    %cst_10 = arith.constant dense<0.000000e+00> : vector<8xf32>
    %31 = vector.multi_reduction <add>, %30, %cst_10 [1] : vector<8x640xf32> to vector<8xf32>
    %32 = vector.shape_cast %31 : vector<8xf32> to vector<8x1xf32>
    %cst_11 = arith.constant dense<0.000000e+00> : vector<1xf32>
    %33 = vector.multi_reduction <add>, %26, %cst_11 [1] : vector<1x640xf32> to vector<1xf32>
    %34 = vector.shape_cast %33 : vector<1xf32> to vector<1x1xf32>
    %c0_12 = arith.constant 0 : index
    %c0_13 = arith.constant 0 : index
    %c0_14 = arith.constant 0 : index
    %35 = vector.load %arg5[%c0_12, %c0_13, %c0_14] : memref<1x8x1xf32, #tpu.memory_space<vmem>>, vector<1x8x1xf32>
    %36 = vector.shape_cast %32 : vector<8x1xf32> to vector<1x8x1xf32>
    %37 = arith.addf %35, %36 : vector<1x8x1xf32>
    %c0_15 = arith.constant 0 : index
    %c0_16 = arith.constant 0 : index
    %c0_17 = arith.constant 0 : index
    %38 = vector.load %arg5[%c0_15, %c0_16, %c0_17] : memref<1x8x1xf32, #tpu.memory_space<vmem>>, vector<1x8x1xf32>
    tpu.vector_store %arg5[%c0_15, %c0_16, %c0_17], %37 {strides = array<i32>} : memref<1x8x1xf32, #tpu.memory_space<vmem>>, vector<1x8x1xf32>,
    %c0_18 = arith.constant 0 : index
    %c0_19 = arith.constant 0 : index
    %c0_20 = arith.constant 0 : index
    %39 = vector.load %arg6[%c0_18, %c0_19, %c0_20] : memref<1x1x1xf32, #tpu.memory_space<vmem>>, vector<1x1x1xf32>
    %40 = vector.shape_cast %34 : vector<1x1xf32> to vector<1x1x1xf32>
    %41 = arith.addf %39, %40 : vector<1x1x1xf32>
    %c0_21 = arith.constant 0 : index
    %c0_22 = arith.constant 0 : index
    %c0_23 = arith.constant 0 : index
    %42 = vector.load %arg6[%c0_21, %c0_22, %c0_23] : memref<1x1x1xf32, #tpu.memory_space<vmem>>, vector<1x1x1xf32>
    tpu.vector_store %arg6[%c0_21, %c0_22, %c0_23], %41 {strides = array<i32>} : memref<1x1x1xf32, #tpu.memory_space<vmem>>, vector<1x1x1xf32>,
    return
  }
  func.func @transform_0(%arg0: i32, %arg1: i32) -> (i32, i32) {
    %c0_i32 = arith.constant 0 : i32
    %c0_i32_0 = arith.constant 0 : i32
    %c0_i32_1 = arith.constant 0 : i32
    return %c0_i32, %c0_i32_0 : i32, i32
  }
  func.func @transform_1(%arg0: i32, %arg1: i32) -> (i32, i32) {
    %c1_i32 = arith.constant 1 : i32
    %0 = arith.muli %arg0, %c1_i32 : i32
    %1 = arith.addi %0, %arg1 : i32
    %c0_i32 = arith.constant 0 : i32
    %c0_i32_0 = arith.constant 0 : i32
    return %c0_i32, %1 : i32, i32
  }
  func.func @transform_2(%arg0: i32, %arg1: i32) -> (i32, i32) {
    %c1_i32 = arith.constant 1 : i32
    %0 = arith.muli %arg0, %c1_i32 : i32
    %1 = arith.addi %0, %arg1 : i32
    %c0_i32 = arith.constant 0 : i32
    %c0_i32_0 = arith.constant 0 : i32
    return %c0_i32, %1 : i32, i32
  }
  func.func @transform_3(%arg0: i32, %arg1: i32) -> (i32, i32, i32) {
    %c0_i32 = arith.constant 0 : i32
    %c0_i32_0 = arith.constant 0 : i32
    %c0_i32_1 = arith.constant 0 : i32
    return %arg0, %c0_i32, %c0_i32_0 : i32, i32, i32
  }
  func.func @transform_4(%arg0: i32, %arg1: i32) -> (i32, i32, i32) {
    %c0_i32 = arith.constant 0 : i32
    %c0_i32_0 = arith.constant 0 : i32
    %c0_i32_1 = arith.constant 0 : i32
    return %arg0, %c0_i32, %c0_i32_0 : i32, i32, i32
  }
}

module attributes {stable_mosaic.version = 11 : i64} {
  func.func @_infonce_kernel(%arg0: i32, %arg1: i32, %arg2: memref<8x32xf32, #tpu.memory_space<vmem>>, %arg3: memref<32x640xf32, #tpu.memory_space<vmem>>, %arg4: memref<8x640xi8, #tpu.memory_space<vmem>>, %arg5: memref<1x8x1xf32, #tpu.memory_space<vmem>>, %arg6: memref<1x1x1xf32, #tpu.memory_space<vmem>>) attributes {dimension_semantics = [#tpu.dimension_semantics<parallel>, #tpu.dimension_semantics<arbitrary>], iteration_bounds = array<i64: 1, 1>, scalar_prefetch = 0 : i64, scratch_operands = 0 : i64, tpu.core_type = #tpu.core_type<tc>, window_params = [{pipeline_mode = #tpu.pipeline_mode<synchronous>, transform_indices = @transform_0, window_bounds = array<i64: 8, 32>}, {transform_indices = @transform_1, window_bounds = array<i64: 32, 640>}, {transform_indices = @transform_2, window_bounds = array<i64: 8, 640>}, {transform_indices = @transform_3, window_bounds = array<i64: 1, 8, 1>}, {transform_indices = @transform_4, window_bounds = array<i64: 1, 1, 1>}]} {
    %c0_i32 = arith.constant 0 : i32
    %0 = arith.cmpi eq, %arg1, %c0_i32 : i32
    %1 = arith.extui %0 : i1 to i32
    %c0_i32_0 = arith.constant 0 : i32
    %2 = arith.cmpi ne, %1, %c0_i32_0 : i32
    scf.if %2 {
      %cst_24 = arith.constant 0.000000e+00 : f32
      %43 = vector.broadcast %cst_24 : f32 to vector<1x8x1xf32>
      %c0_25 = arith.constant 0 : index
      %c0_26 = arith.constant 0 : index
      %c0_27 = arith.constant 0 : index
      %44 = vector.load %arg5[%c0_25, %c0_26, %c0_27] : memref<1x8x1xf32, #tpu.memory_space<vmem>>, vector<1x8x1xf32>
      tpu.vector_store %arg5[%c0_25, %c0_26, %c0_27], %43 {strides = array<i32>} : memref<1x8x1xf32, #tpu.memory_space<vmem>>, vector<1x8x1xf32>,
      %cst_28 = arith.constant 0.000000e+00 : f32
      %45 = vector.broadcast %cst_28 : f32 to vector<1x1x1xf32>
      %c0_29 = arith.constant 0 : index
      %c0_30 = arith.constant 0 : index
      %c0_31 = arith.constant 0 : index
      %46 = vector.load %arg6[%c0_29, %c0_30, %c0_31] : memref<1x1x1xf32, #tpu.memory_space<vmem>>, vector<1x1x1xf32>
      tpu.vector_store %arg6[%c0_29, %c0_30, %c0_31], %45 {strides = array<i32>} : memref<1x1x1xf32, #tpu.memory_space<vmem>>, vector<1x1x1xf32>,
    } else {
    }
    %c0 = arith.constant 0 : index
    %c0_1 = arith.constant 0 : index
    %3 = vector.load %arg3[%c0, %c0_1] : memref<32x640xf32, #tpu.memory_space<vmem>>, vector<32x640xf32>
    %4 = arith.mulf %3, %3 : vector<32x640xf32>
    %cst = arith.constant dense<0.000000e+00> : vector<640xf32>
    %5 = vector.multi_reduction <add>, %4, %cst [0] : vector<32x640xf32> to vector<640xf32>
    %6 = vector.shape_cast %5 : vector<640xf32> to vector<1x640xf32>
    %cst_2 = arith.constant 1.000000e-24 : f32
    %7 = vector.broadcast %cst_2 : f32 to vector<1x640xf32>
    %8 = arith.maximumf %6, %7 : vector<1x640xf32>
    %9 = math.rsqrt %8 : vector<1x640xf32>
    %10 = vector.broadcast %9 : vector<1x640xf32> to vector<32x640xf32>
    %11 = arith.mulf %3, %10 : vector<32x640xf32>
    %c0_3 = arith.constant 0 : index
    %c0_4 = arith.constant 0 : index
    %12 = vector.load %arg2[%c0_3, %c0_4] : memref<8x32xf32, #tpu.memory_space<vmem>>, vector<8x32xf32>
    %cst_5 = arith.constant dense<0.000000e+00> : vector<8x640xf32>
    %13 = tpu.matmul %12, %11, %cst_5 {dimension_numbers = #tpu.dot_dimension_numbers<[1], [0], [0], [1], [0, 0, 1, 1], [], []>} : vector<8x32xf32>, vector<32x640xf32>, vector<8x640xf32> -> vector<8x640xf32>
    %cst_6 = arith.constant dense<0xFF800000> : vector<640xf32>
    %14 = vector.multi_reduction <maximumf>, %13, %cst_6 [0] : vector<8x640xf32> to vector<640xf32>
    %15 = vector.shape_cast %14 : vector<640xf32> to vector<1x640xf32>
    %16 = math.exp %15 : vector<1x640xf32>
    %c1_i32 = arith.constant 1 : i32
    %17 = arith.muli %arg0, %c1_i32 : i32
    %18 = arith.addi %17, %arg1 : i32
    %c640_i32 = arith.constant 640 : i32
    %19 = arith.muli %18, %c640_i32 : i32
    %20 = tpu.iota {dimensions = array<i32: 1>} : vector<1x640xi32>
    %21 = vector.broadcast %19 : i32 to vector<1x640xi32>
    %22 = arith.addi %21, %20 : vector<1x640xi32>
    %c520_i32 = arith.constant 520 : i32
    %23 = vector.broadcast %c520_i32 : i32 to vector<1x640xi32>
    %24 = arith.cmpi slt, %22, %23 : vector<1x640xi32>
    %cst_7 = arith.constant 0.000000e+00 : f32
    %25 = vector.broadcast %cst_7 : f32 to vector<1x640xf32>
    %26 = arith.select %24, %16, %25 : vector<1x640xi1>, vector<1x640xf32>
    %c0_8 = arith.constant 0 : index
    %c0_9 = arith.constant 0 : index
    %27 = vector.load %arg4[%c0_8, %c0_9] : memref<8x640xi8, #tpu.memory_space<vmem>>, vector<8x640xi8>
    %28 = arith.sitofp %27 : vector<8x640xi8> to vector<8x640xf32>
    %29 = vector.broadcast %26 : vector<1x640xf32> to vector<8x640xf32>
    %30 = arith.mulf %28, %29 : vector<8x640xf32>
    %cst_10 = arith.constant dense<0.000000e+00> : vector<8xf32>
    %31 = vector.multi_reduction <add>, %30, %cst_10 [1] : vector<8x640xf32> to vector<8xf32>
    %32 = vector.shape_cast %31 : vector<8xf32> to vector<8x1xf32>
    %cst_11 = arith.constant dense<0.000000e+00> : vector<1xf32>
    %33 = vector.multi_reduction <add>, %26, %cst_11 [1] : vector<1x640xf32> to vector<1xf32>
    %34 = vector.shape_cast %33 : vector<1xf32> to vector<1x1xf32>
    %c0_12 = arith.constant 0 : index
    %c0_13 = arith.constant 0 : index
    %c0_14 = arith.constant 0 : index
    %35 = vector.load %arg5[%c0_12, %c0_13, %c0_14] : memref<1x8x1xf32, #tpu.memory_space<vmem>>, vector<1x8x1xf32>
    %36 = vector.shape_cast %32 : vector<8x1xf32> to vector<1x8x1xf32>
    %37 = arith.addf %35, %36 : vector<1x8x1xf32>
    %c0_15 = arith.constant 0 : index
    %c0_16 = arith.constant 0 : index
    %c0_17 = arith.constant 0 : index
    %38 = vector.load %arg5[%c0_15, %c0_16, %c0_17] : memref<1x8x1xf32, #tpu.memory_space<vmem>>, vector<1x8x1xf32>
    tpu.vector_store %arg5[%c0_15, %c0_16, %c0_17], %37 {strides = array<i32>} : memref<1x8x1xf32, #tpu.memory_space<vmem>>, vector<1x8x1xf32>,
    %c0_18 = arith.constant 0 : index
    %c0_19 = arith.constant 0 : index
    %c0_20 = arith.constant 0 : index
    %39 = vector.load %arg6[%c0_18, %c0_19, %c0_20] : memref<1x1x1xf32, #tpu.memory_space<vmem>>, vector<1x1x1xf32>
    %40 = vector.shape_cast %34 : vector<1x1xf32> to vector<1x1x1xf32>
    %41 = arith.addf %39, %40 : vector<1x1x1xf32>
    %c0_21 = arith.constant 0 : index
    %c0_22 = arith.constant 0 : index
    %c0_23 = arith.constant 0 : index
    %42 = vector.load %arg6[%c0_21, %c0_22, %c0_23] : memref<1x1x1xf32, #tpu.memory_space<vmem>>, vector<1x1x1xf32>
    tpu.vector_store %arg6[%c0_21, %c0_22, %c0_23], %41 {strides = array<i32>} : memref<1x1x1xf32, #tpu.memory_space<vmem>>, vector<1x1x1xf32>,
    return
  }
  func.func @transform_0(%arg0: i32, %arg1: i32) -> (i32, i32) {
    %c0_i32 = arith.constant 0 : i32
    %c0_i32_0 = arith.constant 0 : i32
    %c0_i32_1 = arith.constant 0 : i32
    return %c0_i32, %c0_i32_0 : i32, i32
  }
  func.func @transform_1(%arg0: i32, %arg1: i32) -> (i32, i32) {
    %c1_i32 = arith.constant 1 : i32
    %0 = arith.muli %arg0, %c1_i32 : i32
    %1 = arith.addi %0, %arg1 : i32
    %c0_i32 = arith.constant 0 : i32
    %c0_i32_0 = arith.constant 0 : i32
    return %c0_i32, %1 : i32, i32
  }
  func.func @transform_2(%arg0: i32, %arg1: i32) -> (i32, i32) {
    %c1_i32 = arith.constant 1 : i32
    %0 = arith.muli %arg0, %c1_i32 : i32
    %1 = arith.addi %0, %arg1 : i32
    %c0_i32 = arith.constant 0 : i32
    %c0_i32_0 = arith.constant 0 : i32
    return %c0_i32, %1 : i32, i32
  }
  func.func @transform_3(%arg0: i32, %arg1: i32) -> (i32, i32, i32) {
    %c0_i32 = arith.constant 0 : i32
    %c0_i32_0 = arith.constant 0 : i32
    %c0_i32_1 = arith.constant 0 : i32
    return %arg0, %c0_i32, %c0_i32_0 : i32, i32, i32
  }
  func.func @transform_4(%arg0: i32, %arg1: i32) -> (i32, i32, i32) {
    %c0_i32 = arith.constant 0 : i32
    %c0_i32_0 = arith.constant 0 : i32
    %c0_i32_1 = arith.constant 0 : i32
    return %arg0, %c0_i32, %c0_i32_0 : i32, i32, i32
  }
}

</mosaic_0001>

<llo_original>
// kernel: tpu_custom_call.1
$region0: #{tpu_custom_call.1}
  #allocation0 [shape = 'u32[]', space=smem, size = 0x4, offset = 0x4, fixed_abs, tag = 'smem constant byte address 0x4 - core index']
  #allocation1 [shape = 'u32[72,128]{1,0:T(1,128)}', space=vmem, size = 0x9000, scoped, tag = 'internal scratch']
  %s0 = inlined_call_operand.hbm [shape: f32[8,32], index: 0, kind: input, shape index: {}]
  %s1 = inlined_call_operand.hbm [shape: f32[32,640], index: 1, kind: input, shape index: {}]
  %s2 = inlined_call_operand.hbm [shape: s8[8,640], index: 2, kind: input, shape index: {}]
  %s3 = inlined_call_operand.vmem [shape: f32[1,8,1], index: 3, kind: output, shape index: {0}]
  %s4 = inlined_call_operand.hbm [shape: f32[1,1,1], index: 4, kind: output, shape index: {1}]
  %5 = xla_tuple %s3, %s4
  %s6 = sld [smem:[#allocation0]]
  $region46: #{tpu_custom_call.1} parent=0
    _
  %s8 = ssub.s32 1, %s6
  %s9 = scalar_select 0, %s8, %s6
  $region1: #{tpu_custom_call.1} parent=0
    #allocation2 [shape = 'u8[4096]{0}', space=vmem, size = 0x1000, scoped, tag = 'input window, operand 0, single buffered']
    #allocation3 [shape = 's32[1]{0}', space=sflag, size = 0x4, scoped, tag = 'scoped memory for tpu_custom_call.1']
    #allocation4 [shape = 's32[1]{0}', space=sflag, size = 0x4, scoped, tag = 'scoped memory for tpu_custom_call.1']
    #allocation5 [shape = 'u8[81920]{0}', space=vmem, size = 0x14000, scoped, tag = 'input window, operand 1, single buffered']
    #allocation6 [shape = 's32[1]{0}', space=sflag, size = 0x4, scoped, tag = 'scoped memory for tpu_custom_call.1']
    #allocation7 [shape = 'u8[5120]{0}', space=vmem, size = 0x1400, scoped, tag = 'input window, operand 2, single buffered']
    #allocation8 [shape = 'u8[512]{0}', space=vmem, size = 0x400, scoped, tag = 'output window, operand 1, single buffered']
    %10 = vsyncpa [#allocation3], 0
    %11 = vsyncpa [#allocation6], 0
    %12 = vsyncpa [#allocation4], 0
    // Predicated region
    $region2: #{tpu_custom_call.1} parent=1 // pred_check
      _
    $region3: #{tpu_custom_call.1} parent=1 // pred_check_branch
      %14 = sbr.rel (0) target = $region5
    $region4: #{tpu_custom_call.1} parent=1 // pred_region
      %16 = vsyncadd [#allocation3], 0
      %s18 = sshll.u32 %s0, 4
      %s19 = int_to_ptr.hbm [resolvable:$true] %s18
      %s20 = sshll.u32 [#allocation2], 4
      %s21 = int_to_ptr.vmem [resolvable:$true] %s20
      %23 = dma.hbm_to_vmem [thread:$0]  %s19, 128, %s21, [#allocation3]
    $region5: #{tpu_custom_call.1} parent=1 // pred_fallthru
      _
    // Predicated region
    $region6: #{tpu_custom_call.1} parent=1 // pred_check
      _
    $region7: #{tpu_custom_call.1} parent=1 // pred_check_branch
      %25 = sbr.rel (0) target = $region9
    $region8: #{tpu_custom_call.1} parent=1 // pred_region
      %s26 = sadd.s32 0, 0
      %s27 = smul.u32 5, %s26
      %29 = vsyncadd [#allocation6], 0
      %s30 = smul.addr %s27, 8
      %s31 = scalar_lea.hbm %s1, %s30
      %s32 = sshll.u32 %s31, 4
      %s33 = int_to_ptr.hbm [resolvable:$true] %s32
      %s34 = sshll.u32 [#allocation5], 4
      %s35 = int_to_ptr.vmem [resolvable:$true] %s34
      %40 = dma.hbm_to_vmem [thread:$0]  %s33, 2560, %s35, [#allocation6], 640, 640, 40
    $region9: #{tpu_custom_call.1} parent=1 // pred_fallthru
      _
    // Predicated region
    $region10: #{tpu_custom_call.1} parent=1 // pred_check
      _
    $region11: #{tpu_custom_call.1} parent=1 // pred_check_branch
      %42 = sbr.rel (0) target = $region13
    $region12: #{tpu_custom_call.1} parent=1 // pred_region
      %s43 = sadd.s32 0, 0
      %s44 = smul.u32 5, %s43
      %46 = vsyncadd [#allocation6], 0
      %s47 = smul.addr %s44, 2
      %s48 = scalar_lea.hbm %s2, %s47
      %s50 = sshll.u32 %s48, 4
      %s51 = int_to_ptr.hbm [resolvable:$true] %s50
      %s52 = sshll.u32 [#allocation7], 4
      %s53 = int_to_ptr.vmem [resolvable:$true] %s52
      %55 = dma.hbm_to_vmem [thread:$0]  %s51, 160, %s53, [#allocation6]
    $region13: #{tpu_custom_call.1} parent=1 // pred_fallthru
      _
    // Predicated region
    $region14: #{tpu_custom_call.1} parent=1 // pred_check
      _
    $region15: #{tpu_custom_call.1} parent=1 // pred_check_branch
      %57 = sbr.rel (0) target = $region17
    $region16: #{tpu_custom_call.1} parent=1 // pred_region
      %59 = dma.done [#allocation3], 128
    $region17: #{tpu_custom_call.1} parent=1 // pred_fallthru
      _
    // Predicated region
    $region18: #{tpu_custom_call.1} parent=1 // pred_check
      _
    $region19: #{tpu_custom_call.1} parent=1 // pred_check_branch
      %61 = sbr.rel (0) target = $region21
    $region20: #{tpu_custom_call.1} parent=1 // pred_region
      %63 = dma.done [#allocation6], 2560
    $region21: #{tpu_custom_call.1} parent=1 // pred_fallthru
      _
    // Predicated region
    $region22: #{tpu_custom_call.1} parent=1 // pred_check
      _
    $region23: #{tpu_custom_call.1} parent=1 // pred_check_branch
      %65 = sbr.rel (0) target = $region25
    $region24: #{tpu_custom_call.1} parent=1 // pred_region
      %67 = dma.done [#allocation6], 160
    $region25: #{tpu_custom_call.1} parent=1 // pred_fallthru
      _
    %s68 = sadd.s32 0, 0
    %s69 = smul.u32 5, %s68
    %s70 = sadd.s32 0, 0
    %s71 = smul.u32 5, %s70
    %p72 = scmp.eq.s32.totalorder 0, 0
    // Predicated region
    $region26: #{tpu_custom_call.1} parent=1 // pred_check
      %p73 = pneg %p72
    $region27: #{tpu_custom_call.1} parent=1 // pred_check_branch
      %75 = sbr.rel (%p73) target = $region29
    $region28: #{tpu_custom_call.1} parent=1 // pred_region
      %vm76 = vcmask 7168
      %77 = vst.msk [vmem:[%s3] sm:$0xff] %vm76, 0.0
      %vm78 = vcmask 0
      %79 = vst.msk [vmem:[#allocation8] sm:$0x1] %vm78, 0.0
    $region29: #{tpu_custom_call.1} parent=1 // pred_fallthru
      _
    %v80 = vld [vmem:[#allocation5] sm:$0xff]
    %v81 = vld [vmem:[#allocation5 + $0x8] sm:$0xff]
    %v82 = vld [vmem:[#allocation5 + $0x10] sm:$0xff]
    %v83 = vld [vmem:[#allocation5 + $0x18] sm:$0xff]
    %v84 = vld [vmem:[#allocation5 + $0x20] sm:$0xff]
    %v85 = vld [vmem:[#allocation5 + $0x28] sm:$0xff]
    %v86 = vld [vmem:[#allocation5 + $0x30] sm:$0xff]
    %v87 = vld [vmem:[#allocation5 + $0x38] sm:$0xff]
    %v88 = vld [vmem:[#allocation5 + $0x40] sm:$0xff]
    %v89 = vld [vmem:[#allocation5 + $0x48] sm:$0xff]
    %v90 = vld [vmem:[#allocation5 + $0x50] sm:$0xff]
    %v91 = vld [vmem:[#allocation5 + $0x58] sm:$0xff]
    %v92 = vld [vmem:[#allocation5 + $0x60] sm:$0xff]
    %v93 = vld [vmem:[#allocation5 + $0x68] sm:$0xff]
    %v94 = vld [vmem:[#allocation5 + $0x70] sm:$0xff]
    %v95 = vld [vmem:[#allocation5 + $0x78] sm:$0xff]
    %v96 = vld [vmem:[#allocation5 + $0x80] sm:$0xff]
    %v97 = vld [vmem:[#allocation5 + $0x88] sm:$0xff]
    %v98 = vld [vmem:[#allocation5 + $0x90] sm:$0xff]
    %v99 = vld [vmem:[#allocation5 + $0x98] sm:$0xff]
    %v100 = vmul.f32 %v80, %v80
    %v101 = vmul.f32 %v81, %v81
    %v102 = vmul.f32 %v82, %v82
    %v103 = vmul.f32 %v83, %v83
    %v104 = vmul.f32 %v84, %v84
    %v105 = vmul.f32 %v85, %v85
    %v106 = vmul.f32 %v86, %v86
    %v107 = vmul.f32 %v87, %v87
    %v108 = vmul.f32 %v88, %v88
    %v109 = vmul.f32 %v89, %v89
    %v110 = vmul.f32 %v90, %v90
    %v111 = vmul.f32 %v91, %v91
    %v112 = vmul.f32 %v92, %v92
    %v113 = vmul.f32 %v93, %v93
    %v114 = vmul.f32 %v94, %v94
    %v115 = vmul.f32 %v95, %v95
    %v116 = vmul.f32 %v96, %v96
    %v117 = vmul.f32 %v97, %v97
    %v118 = vmul.f32 %v98, %v98
    %v119 = vmul.f32 %v99, %v99
    %v120 = vadd.f32 %v100, %v105
    %v121 = vadd.f32 %v120, %v110
    %v122 = vadd.f32 %v121, %v115
    %v123 = vrot.slane %v122, 4
    %v124 = vadd.f32 %v122, %v123
    %v125 = vrot.slane %v124, 2
    %v126 = vadd.f32 %v124, %v125
    %v127 = vrot.slane %v126, 1
    %v128 = vadd.f32 %v126, %v127
    %v129 = vadd.f32 %v101, %v106
    %v130 = vadd.f32 %v129, %v111
    %v131 = vadd.f32 %v130, %v116
    %v132 = vrot.slane %v131, 4
    %v133 = vadd.f32 %v131, %v132
    %v134 = vrot.slane %v133, 2
    %v135 = vadd.f32 %v133, %v134
    %v136 = vrot.slane %v135, 1
    %v137 = vadd.f32 %v135, %v136
    %v138 = vadd.f32 %v102, %v107
    %v139 = vadd.f32 %v138, %v112
    %v140 = vadd.f32 %v139, %v117
    %v141 = vrot.slane %v140, 4
    %v142 = vadd.f32 %v140, %v141
    %v143 = vrot.slane %v142, 2
    %v144 = vadd.f32 %v142, %v143
    %v145 = vrot.slane %v144, 1
    %v146 = vadd.f32 %v144, %v145
    %v147 = vadd.f32 %v103, %v108
    %v148 = vadd.f32 %v147, %v113
    %v149 = vadd.f32 %v148, %v118
    %v150 = vrot.slane %v149, 4
    %v151 = vadd.f32 %v149, %v150
    %v152 = vrot.slane %v151, 2
    %v153 = vadd.f32 %v151, %v152
    %v154 = vrot.slane %v153, 1
    %v155 = vadd.f32 %v153, %v154
    %v156 = vadd.f32 %v104, %v109
    %v157 = vadd.f32 %v156, %v114
    %v158 = vadd.f32 %v157, %v119
    %v159 = vrot.slane %v158, 4
    %v160 = vadd.f32 %v158, %v159
    %v161 = vrot.slane %v160, 2
    %v162 = vadd.f32 %v160, %v161
    %v163 = vrot.slane %v162, 1
    %v164 = vadd.f32 %v162, %v163
    %v165 = vmax.f32 %v128, 1e-24
    %v166 = vmax.f32 %v137, 1e-24
    %v167 = vmax.f32 %v146, 1e-24
    %v168 = vmax.f32 %v155, 1e-24
    %v169 = vmax.f32 %v164, 1e-24
    %v170 = vrsqrt.pop %v165
    %v171 = vmul.f32 %v170, %v165
    %v172 = vmul.f32 %v171, %v170
    %v173 = vmul.f32 0.5, %v172
    %v174 = vsub.f32 1.5, %v173
    %v175 = vmul.f32 %v170, %v174
    %vm176 = vweird.f32 %v165
    %vm177 = vweird.f32 %v170
    %vm178 = vmor %vm176, %vm177
    %v179 = vsel %vm178, %v170, %v175
    %v180 = vrsqrt.pop %v166
    %v181 = vmul.f32 %v180, %v166
    %v182 = vmul.f32 %v181, %v180
    %v183 = vmul.f32 0.5, %v182
    %v184 = vsub.f32 1.5, %v183
    %v185 = vmul.f32 %v180, %v184
    %vm186 = vweird.f32 %v166
    %vm187 = vweird.f32 %v180
    %vm188 = vmor %vm186, %vm187
    %v189 = vsel %vm188, %v180, %v185
    %v190 = vrsqrt.pop %v167
    %v191 = vmul.f32 %v190, %v167
    %v192 = vmul.f32 %v191, %v190
    %v193 = vmul.f32 0.5, %v192
    %v194 = vsub.f32 1.5, %v193
    %v195 = vmul.f32 %v190, %v194
    %vm196 = vweird.f32 %v167
    %vm197 = vweird.f32 %v190
    %vm198 = vmor %vm196, %vm197
    %v199 = vsel %vm198, %v190, %v195
    %v200 = vrsqrt.pop %v168
    %v201 = vmul.f32 %v200, %v168
    %v202 = vmul.f32 %v201, %v200
    %v203 = vmul.f32 0.5, %v202
    %v204 = vsub.f32 1.5, %v203
    %v205 = vmul.f32 %v200, %v204
    %vm206 = vweird.f32 %v168
    %vm207 = vweird.f32 %v200
    %vm208 = vmor %vm206, %vm207
    %v209 = vsel %vm208, %v200, %v205
    %v210 = vrsqrt.pop %v169
    %v211 = vmul.f32 %v210, %v169
    %v212 = vmul.f32 %v211, %v210
    %v213 = vmul.f32 0.5, %v212
    %v214 = vsub.f32 1.5, %v213
    %v215 = vmul.f32 %v210, %v214
    %vm216 = vweird.f32 %v169
    %vm217 = vweird.f32 %v210
    %vm218 = vmor %vm216, %vm217
    %v219 = vsel %vm218, %v210, %v215
    %v220 = vmul.f32 %v80, %v179
    %v221 = vmul.f32 %v81, %v189
    %v222 = vmul.f32 %v82, %v199
    %v223 = vmul.f32 %v83, %v209
    %v224 = vmul.f32 %v84, %v219
    %v225 = vmul.f32 %v85, %v179
    %v226 = vmul.f32 %v86, %v189
    %v227 = vmul.f32 %v87, %v199
    %v228 = vmul.f32 %v88, %v209
    %v229 = vmul.f32 %v89, %v219
    %v230 = vmul.f32 %v90, %v179
    %v231 = vmul.f32 %v91, %v189
    %v232 = vmul.f32 %v92, %v199
    %v233 = vmul.f32 %v93, %v209
    %v234 = vmul.f32 %v94, %v219
    %v235 = vmul.f32 %v95, %v179
    %v236 = vmul.f32 %v96, %v189
    %v237 = vmul.f32 %v97, %v199
    %v238 = vmul.f32 %v98, %v209
    %v239 = vmul.f32 %v99, %v219
    %v240 = vld [vmem:[#allocation2] sm:$0xff]
    %vm241 = vcmask 261120
    %v243 = vsel %vm241, %v240, 0
    %245 = vmatpush.msra.mxu0 0.0
    %246 = vmatpush.msra.mxu0 0.0
    %247 = vmatpush.msra.mxu0 0.0
    %248 = vmatpush.msra.mxu0 0.0
    %249 = vmatpush.msra.mxu0 0.0
    %250 = vmatpush.msra.mxu0 0.0
    %251 = vmatpush.msra.mxu0 0.0
    %252 = vmatpush.msra.mxu0 0.0
    %253 = vmatpush.msra.mxu0 0.0
    %254 = vmatpush.msra.mxu0 0.0
    %255 = vmatpush.msra.mxu0 0.0
    %256 = vmatpush.msra.mxu0 0.0
    %257 = vmatpush.msra.mxu0 %v235
    %258 = vmatpush.msra.mxu0 %v230
    %259 = vmatpush.msra.mxu0 %v225
    %260 = vmatpush.msra.mxu0 %v220
    %261 = vmatmul.f32.gmra.mxu0 %v243
    %v262 = vpop.f32.mrf.mxu0
    %v263 = vadd.f32 0.0, %v262
    %264 = vdwg.mxu0
    %265 = vmatpush.msra.mxu0 0.0
    %266 = vmatpush.msra.mxu0 0.0
    %267 = vmatpush.msra.mxu0 0.0
    %268 = vmatpush.msra.mxu0 0.0
    %269 = vmatpush.msra.mxu0 0.0
    %270 = vmatpush.msra.mxu0 0.0
    %271 = vmatpush.msra.mxu0 0.0
    %272 = vmatpush.msra.mxu0 0.0
    %273 = vmatpush.msra.mxu0 0.0
    %274 = vmatpush.msra.mxu0 0.0
    %275 = vmatpush.msra.mxu0 0.0
    %276 = vmatpush.msra.mxu0 0.0
    %277 = vmatpush.msra.mxu0 %v236
    %278 = vmatpush.msra.mxu0 %v231
    %279 = vmatpush.msra.mxu0 %v226
    %280 = vmatpush.msra.mxu0 %v221
    %281 = vmatmul.f32.gmra.mxu0 %v243
    %v282 = vpop.f32.mrf.mxu0
    %v283 = vadd.f32 0.0, %v282
    %284 = vdwg.mxu0
    %285 = vmatpush.msra.mxu0 0.0
    %286 = vmatpush.msra.mxu0 0.0
    %287 = vmatpush.msra.mxu0 0.0
    %288 = vmatpush.msra.mxu0 0.0
    %289 = vmatpush.msra.mxu0 0.0
    %290 = vmatpush.msra.mxu0 0.0
    %291 = vmatpush.msra.mxu0 0.0
    %292 = vmatpush.msra.mxu0 0.0
    %293 = vmatpush.msra.mxu0 0.0
    %294 = vmatpush.msra.mxu0 0.0
    %295 = vmatpush.msra.mxu0 0.0
    %296 = vmatpush.msra.mxu0 0.0
    %297 = vmatpush.msra.mxu0 %v237
    %298 = vmatpush.msra.mxu0 %v232
    %299 = vmatpush.msra.mxu0 %v227
    %300 = vmatpush.msra.mxu0 %v222
    %301 = vmatmul.f32.gmra.mxu0 %v243
    %v302 = vpop.f32.mrf.mxu0
    %v303 = vadd.f32 0.0, %v302
    %304 = vdwg.mxu0
    %305 = vmatpush.msra.mxu0 0.0
    %306 = vmatpush.msra.mxu0 0.0
    %307 = vmatpush.msra.mxu0 0.0
    %308 = vmatpush.msra.mxu0 0.0
    %309 = vmatpush.msra.mxu0 0.0
    %310 = vmatpush.msra.mxu0 0.0
    %311 = vmatpush.msra.mxu0 0.0
    %312 = vmatpush.msra.mxu0 0.0
    %313 = vmatpush.msra.mxu0 0.0
    %314 = vmatpush.msra.mxu0 0.0
    %315 = vmatpush.msra.mxu0 0.0
    %316 = vmatpush.msra.mxu0 0.0
    %317 = vmatpush.msra.mxu0 %v238
    %318 = vmatpush.msra.mxu0 %v233
    %319 = vmatpush.msra.mxu0 %v228
    %320 = vmatpush.msra.mxu0 %v223
    %321 = vmatmul.f32.gmra.mxu0 %v243
    %v322 = vpop.f32.mrf.mxu0
    %v323 = vadd.f32 0.0, %v322
    %324 = vdwg.mxu0
    %325 = vmatpush.msra.mxu0 0.0
    %326 = vmatpush.msra.mxu0 0.0
    %327 = vmatpush.msra.mxu0 0.0
    %328 = vmatpush.msra.mxu0 0.0
    %329 = vmatpush.msra.mxu0 0.0
    %330 = vmatpush.msra.mxu0 0.0
    %331 = vmatpush.msra.mxu0 0.0
    %332 = vmatpush.msra.mxu0 0.0
    %333 = vmatpush.msra.mxu0 0.0
    %334 = vmatpush.msra.mxu0 0.0
    %335 = vmatpush.msra.mxu0 0.0
    %336 = vmatpush.msra.mxu0 0.0
    %337 = vmatpush.msra.mxu0 %v239
    %338 = vmatpush.msra.mxu0 %v234
    %339 = vmatpush.msra.mxu0 %v229
    %340 = vmatpush.msra.mxu0 %v224
    %341 = vmatmul.f32.gmra.mxu0 %v243
    %v342 = vpop.f32.mrf.mxu0
    %v343 = vadd.f32 0.0, %v342
    %344 = vdwg.mxu0
    %v345 = vrot.slane %v263, 4
    %v346 = vmax.f32 %v263, %v345
    %v347 = vrot.slane %v346, 2
    %v348 = vmax.f32 %v346, %v347
    %v349 = vrot.slane %v348, 1
    %v350 = vmax.f32 %v348, %v349
    %v351 = vrot.slane %v283, 4
    %v352 = vmax.f32 %v283, %v351
    %v353 = vrot.slane %v352, 2
    %v354 = vmax.f32 %v352, %v353
    %v355 = vrot.slane %v354, 1
    %v356 = vmax.f32 %v354, %v355
    %v357 = vrot.slane %v303, 4
    %v358 = vmax.f32 %v303, %v357
    %v359 = vrot.slane %v358, 2
    %v360 = vmax.f32 %v358, %v359
    %v361 = vrot.slane %v360, 1
    %v362 = vmax.f32 %v360, %v361
    %v363 = vrot.slane %v323, 4
    %v364 = vmax.f32 %v323, %v363
    %v365 = vrot.slane %v364, 2
    %v366 = vmax.f32 %v364, %v365
    %v367 = vrot.slane %v366, 1
    %v368 = vmax.f32 %v366, %v367
    %v369 = vrot.slane %v343, 4
    %v370 = vmax.f32 %v343, %v369
    %v371 = vrot.slane %v370, 2
    %v372 = vmax.f32 %v370, %v371
    %v373 = vrot.slane %v372, 1
    %v374 = vmax.f32 %v372, %v373
    %v375 = vmul.f32 %v350, 1.442695
    %v376 = vpow.pop %v375
    %v377 = vmul.f32 %v356, 1.442695
    %v378 = vpow.pop %v377
    %v379 = vmul.f32 %v362, 1.442695
    %v380 = vpow.pop %v379
    %v381 = vmul.f32 %v368, 1.442695
    %v382 = vpow.pop %v381
    %v383 = vmul.f32 %v374, 1.442695
    %v384 = vpow.pop %v383
    %s385 = sadd.s32 0, 0
    %s386 = smul.u32 %s385, 640
    %v387 = vlaneseq
    %v388 = vand.u32 %v387, 127
    %v389 = vadd.s32 %v388, 128
    %v390 = vadd.s32 %v388, 256
    %v391 = vadd.s32 %v388, 384
    %v392 = vadd.s32 %v388, 512
    %v393 = vstv %s386
    %v394 = vadd.s32 %v393, %v388
    %v395 = vadd.s32 %v393, %v389
    %v396 = vadd.s32 %v393, %v390
    %v397 = vadd.s32 %v393, %v391
    %v398 = vadd.s32 %v393, %v392
    %vm399 = vcmp.lt.s32.totalorder %v394, 520
    %vm400 = vcmp.lt.s32.totalorder %v395, 520
    %vm401 = vcmp.lt.s32.totalorder %v396, 520
    %vm402 = vcmp.lt.s32.totalorder %v397, 520
    %vm403 = vcmp.lt.s32.totalorder %v398, 520
    %v404 = vsel %vm399, %v376, 0.0
    %v405 = vsel %vm400, %v378, 0.0
    %v406 = vsel %vm401, %v380, 0.0
    %v407 = vsel %vm402, %v382, 0.0
    %v408 = vsel %vm403, %v384, 0.0
    %v409 = vld [vmem:[#allocation7] sm:$0xff]
    %v410 = vld [vmem:[#allocation7 + $0x8] sm:$0x3]
    %v411 = vunpack.c.0.s8 %v409
    %v412 = vunpack.c.1.s8 %v409
    %v413 = vunpack.c.2.s8 %v409
    %v414 = vunpack.c.3.s8 %v409
    %v415 = vunpack.c.0.s8 %v410
    %v416 = vcvt.s32.f32 %v411
    %v417 = vcvt.s32.f32 %v412
    %v418 = vcvt.s32.f32 %v413
    %v419 = vcvt.s32.f32 %v414
    %v420 = vcvt.s32.f32 %v415
    %v421 = vmul.f32 %v416, %v404
    %v422 = vmul.f32 %v417, %v405
    %v423 = vmul.f32 %v418, %v406
    %v424 = vmul.f32 %v419, %v407
    %v425 = vmul.f32 %v420, %v408
    %v426 = vadd.f32 %v421, %v422
    %v427 = vadd.f32 %v426, %v423
    %v428 = vadd.f32 %v427, %v424
    %v429 = vadd.f32 %v428, %v425
    %430 = vadd.xlane.f32.xlu0 %v429
    %v431 = vpop.xlane.xlu0 %430
    %v432 = vadd.f32 %v404, %v405
    %v433 = vadd.f32 %v432, %v406
    %v434 = vadd.f32 %v433, %v407
    %v435 = vadd.f32 %v434, %v408
    %436 = vadd.xlane.f32.xlu0 %v435
    %v437 = vpop.xlane.xlu0 %436
    %v438 = vld [vmem:[%s3] sm:$0xff]
    %v439 = vadd.f32 %v438, %v431
    %vm440 = vcmask 7168
    %441 = vst.msk [vmem:[%s3] sm:$0xff] %vm440, %v439
    %v442 = vld [vmem:[#allocation8] sm:$0x1]
    %v443 = vadd.f32 %v442, %v437
    %vm444 = vcmask 0
    %445 = vst.msk [vmem:[#allocation8] sm:$0x1] %vm444, %v443
    // Predicated region
    $region30: #{tpu_custom_call.1} parent=1 // pred_check
      _
    $region31: #{tpu_custom_call.1} parent=1 // pred_check_branch
      %447 = sbr.rel (0) target = $region33
    $region32: #{tpu_custom_call.1} parent=1 // pred_region
      _
    $region33: #{tpu_custom_call.1} parent=1 // pred_fallthru
      _
    // Predicated region
    $region34: #{tpu_custom_call.1} parent=1 // pred_check
      _
    $region35: #{tpu_custom_call.1} parent=1 // pred_check_branch
      %449 = sbr.rel (0) target = $region37
    $region36: #{tpu_custom_call.1} parent=1 // pred_region
      %451 = vsyncadd [#allocation4], 0
      %s453 = sshll.u32 [#allocation8], 4
      %s454 = int_to_ptr.vmem [resolvable:$true] %s453
      %s455 = sshll.u32 %s4, 4
      %s456 = int_to_ptr.hbm [resolvable:$true] %s455
      %458 = dma.vmem_to_hbm [thread:$0]  %s454, 16, %s456, [#allocation4]
    $region37: #{tpu_custom_call.1} parent=1 // pred_fallthru
      _
    // Predicated region
    $region38: #{tpu_custom_call.1} parent=1 // pred_check
      _
    $region39: #{tpu_custom_call.1} parent=1 // pred_check_branch
      %460 = sbr.rel (0) target = $region41
    $region40: #{tpu_custom_call.1} parent=1 // pred_region
      _
    $region41: #{tpu_custom_call.1} parent=1 // pred_fallthru
      _
    // Predicated region
    $region42: #{tpu_custom_call.1} parent=1 // pred_check
      _
    $region43: #{tpu_custom_call.1} parent=1 // pred_check_branch
      %462 = sbr.rel (0) target = $region45
    $region44: #{tpu_custom_call.1} parent=1 // pred_region
      %464 = dma.done [#allocation4], 16
    $region45: #{tpu_custom_call.1} parent=1 // pred_fallthru
      _
    %465 = vsyncpa [#allocation3], 1
    %466 = vsyncpa [#allocation6], 1
    %467 = vsyncpa [#allocation4], 1

// kernel: tpu_custom_call.1
$region0: #{tpu_custom_call.1}
  #allocation0 [shape = 'u32[]', space=smem, size = 0x4, offset = 0x4, fixed_abs, tag = 'smem constant byte address 0x4 - core index']
  #allocation1 [shape = 'u32[72,128]{1,0:T(1,128)}', space=vmem, size = 0x9000, scoped, tag = 'internal scratch']
  %s0 = inlined_call_operand.hbm [shape: f32[8,32], index: 0, kind: input, shape index: {}]
  %s1 = inlined_call_operand.hbm [shape: f32[32,640], index: 1, kind: input, shape index: {}]
  %s2 = inlined_call_operand.hbm [shape: s8[8,640], index: 2, kind: input, shape index: {}]
  %s3 = inlined_call_operand.vmem [shape: f32[1,8,1], index: 3, kind: output, shape index: {0}]
  %s4 = inlined_call_operand.hbm [shape: f32[1,1,1], index: 4, kind: output, shape index: {1}]
  %5 = xla_tuple %s3, %s4
  %s6 = sld [smem:[#allocation0]]
  $region46: #{tpu_custom_call.1} parent=0
    _
  %s8 = ssub.s32 1, %s6
  %s9 = scalar_select 0, %s8, %s6
  $region1: #{tpu_custom_call.1} parent=0
    #allocation2 [shape = 'u8[4096]{0}', space=vmem, size = 0x1000, scoped, tag = 'input window, operand 0, single buffered']
    #allocation3 [shape = 's32[1]{0}', space=sflag, size = 0x4, scoped, tag = 'scoped memory for tpu_custom_call.1']
    #allocation4 [shape = 's32[1]{0}', space=sflag, size = 0x4, scoped, tag = 'scoped memory for tpu_custom_call.1']
    #allocation5 [shape = 'u8[81920]{0}', space=vmem, size = 0x14000, scoped, tag = 'input window, operand 1, single buffered']
    #allocation6 [shape = 's32[1]{0}', space=sflag, size = 0x4, scoped, tag = 'scoped memory for tpu_custom_call.1']
    #allocation7 [shape = 'u8[5120]{0}', space=vmem, size = 0x1400, scoped, tag = 'input window, operand 2, single buffered']
    #allocation8 [shape = 'u8[512]{0}', space=vmem, size = 0x400, scoped, tag = 'output window, operand 1, single buffered']
    %10 = vsyncpa [#allocation3], 0
    %11 = vsyncpa [#allocation6], 0
    %12 = vsyncpa [#allocation4], 0
    // Predicated region
    $region2: #{tpu_custom_call.1} parent=1 // pred_check
      _
    $region3: #{tpu_custom_call.1} parent=1 // pred_check_branch
      %14 = sbr.rel (0) target = $region5
    $region4: #{tpu_custom_call.1} parent=1 // pred_region
      %16 = vsyncadd [#allocation3], 0
      %s18 = sshll.u32 %s0, 4
      %s19 = int_to_ptr.hbm [resolvable:$true] %s18
      %s20 = sshll.u32 [#allocation2], 4
      %s21 = int_to_ptr.vmem [resolvable:$true] %s20
      %23 = dma.hbm_to_vmem [thread:$0]  %s19, 128, %s21, [#allocation3]
    $region5: #{tpu_custom_call.1} parent=1 // pred_fallthru
      _
    // Predicated region
    $region6: #{tpu_custom_call.1} parent=1 // pred_check
      _
    $region7: #{tpu_custom_call.1} parent=1 // pred_check_branch
      %25 = sbr.rel (0) target = $region9
    $region8: #{tpu_custom_call.1} parent=1 // pred_region
      %s26 = sadd.s32 0, 0
      %s27 = smul.u32 5, %s26
      %29 = vsyncadd [#allocation6], 0
      %s30 = smul.addr %s27, 8
      %s31 = scalar_lea.hbm %s1, %s30
      %s32 = sshll.u32 %s31, 4
      %s33 = int_to_ptr.hbm [resolvable:$true] %s32
      %s34 = sshll.u32 [#allocation5], 4
      %s35 = int_to_ptr.vmem [resolvable:$true] %s34
      %40 = dma.hbm_to_vmem [thread:$0]  %s33, 2560, %s35, [#allocation6], 640, 640, 40
    $region9: #{tpu_custom_call.1} parent=1 // pred_fallthru
      _
    // Predicated region
    $region10: #{tpu_custom_call.1} parent=1 // pred_check
      _
    $region11: #{tpu_custom_call.1} parent=1 // pred_check_branch
      %42 = sbr.rel (0) target = $region13
    $region12: #{tpu_custom_call.1} parent=1 // pred_region
      %s43 = sadd.s32 0, 0
      %s44 = smul.u32 5, %s43
      %46 = vsyncadd [#allocation6], 0
      %s47 = smul.addr %s44, 2
      %s48 = scalar_lea.hbm %s2, %s47
      %s50 = sshll.u32 %s48, 4
      %s51 = int_to_ptr.hbm [resolvable:$true] %s50
      %s52 = sshll.u32 [#allocation7], 4
      %s53 = int_to_ptr.vmem [resolvable:$true] %s52
      %55 = dma.hbm_to_vmem [thread:$0]  %s51, 160, %s53, [#allocation6]
    $region13: #{tpu_custom_call.1} parent=1 // pred_fallthru
      _
    // Predicated region
    $region14: #{tpu_custom_call.1} parent=1 // pred_check
      _
    $region15: #{tpu_custom_call.1} parent=1 // pred_check_branch
      %57 = sbr.rel (0) target = $region17
    $region16: #{tpu_custom_call.1} parent=1 // pred_region
      %59 = dma.done [#allocation3], 128
    $region17: #{tpu_custom_call.1} parent=1 // pred_fallthru
      _
    // Predicated region
    $region18: #{tpu_custom_call.1} parent=1 // pred_check
      _
    $region19: #{tpu_custom_call.1} parent=1 // pred_check_branch
      %61 = sbr.rel (0) target = $region21
    $region20: #{tpu_custom_call.1} parent=1 // pred_region
      %63 = dma.done [#allocation6], 2560
    $region21: #{tpu_custom_call.1} parent=1 // pred_fallthru
      _
    // Predicated region
    $region22: #{tpu_custom_call.1} parent=1 // pred_check
      _
    $region23: #{tpu_custom_call.1} parent=1 // pred_check_branch
      %65 = sbr.rel (0) target = $region25
    $region24: #{tpu_custom_call.1} parent=1 // pred_region
      %67 = dma.done [#allocation6], 160
    $region25: #{tpu_custom_call.1} parent=1 // pred_fallthru
      _
    %s68 = sadd.s32 0, 0
    %s69 = smul.u32 5, %s68
    %s70 = sadd.s32 0, 0
    %s71 = smul.u32 5, %s70
    %p72 = scmp.eq.s32.totalorder 0, 0
    // Predicated region
    $region26: #{tpu_custom_call.1} parent=1 // pred_check
      %p73 = pneg %p72
    $region27: #{tpu_custom_call.1} parent=1 // pred_check_branch
      %75 = sbr.rel (%p73) target = $region29
    $region28: #{tpu_custom_call.1} parent=1 // pred_region
      %vm76 = vcmask 7168
      %77 = vst.msk [vmem:[%s3] sm:$0xff] %vm76, 0.0
      %vm78 = vcmask 0
      %79 = vst.msk [vmem:[#allocation8] sm:$0x1] %vm78, 0.0
    $region29: #{tpu_custom_call.1} parent=1 // pred_fallthru
      _
    %v80 = vld [vmem:[#allocation5] sm:$0xff]
    %v81 = vld [vmem:[#allocation5 + $0x8] sm:$0xff]
    %v82 = vld [vmem:[#allocation5 + $0x10] sm:$0xff]
    %v83 = vld [vmem:[#allocation5 + $0x18] sm:$0xff]
    %v84 = vld [vmem:[#allocation5 + $0x20] sm:$0xff]
    %v85 = vld [vmem:[#allocation5 + $0x28] sm:$0xff]
    %v86 = vld [vmem:[#allocation5 + $0x30] sm:$0xff]
    %v87 = vld [vmem:[#allocation5 + $0x38] sm:$0xff]
    %v88 = vld [vmem:[#allocation5 + $0x40] sm:$0xff]
    %v89 = vld [vmem:[#allocation5 + $0x48] sm:$0xff]
    %v90 = vld [vmem:[#allocation5 + $0x50] sm:$0xff]
    %v91 = vld [vmem:[#allocation5 + $0x58] sm:$0xff]
    %v92 = vld [vmem:[#allocation5 + $0x60] sm:$0xff]
    %v93 = vld [vmem:[#allocation5 + $0x68] sm:$0xff]
    %v94 = vld [vmem:[#allocation5 + $0x70] sm:$0xff]
    %v95 = vld [vmem:[#allocation5 + $0x78] sm:$0xff]
    %v96 = vld [vmem:[#allocation5 + $0x80] sm:$0xff]
    %v97 = vld [vmem:[#allocation5 + $0x88] sm:$0xff]
    %v98 = vld [vmem:[#allocation5 + $0x90] sm:$0xff]
    %v99 = vld [vmem:[#allocation5 + $0x98] sm:$0xff]
    %v100 = vmul.f32 %v80, %v80
    %v101 = vmul.f32 %v81, %v81
    %v102 = vmul.f32 %v82, %v82
    %v103 = vmul.f32 %v83, %v83
    %v104 = vmul.f32 %v84, %v84
    %v105 = vmul.f32 %v85, %v85
    %v106 = vmul.f32 %v86, %v86
    %v107 = vmul.f32 %v87, %v87
    %v108 = vmul.f32 %v88, %v88
    %v109 = vmul.f32 %v89, %v89
    %v110 = vmul.f32 %v90, %v90
    %v111 = vmul.f32 %v91, %v91
    %v112 = vmul.f32 %v92, %v92
    %v113 = vmul.f32 %v93, %v93
    %v114 = vmul.f32 %v94, %v94
    %v115 = vmul.f32 %v95, %v95
    %v116 = vmul.f32 %v96, %v96
    %v117 = vmul.f32 %v97, %v97
    %v118 = vmul.f32 %v98, %v98
    %v119 = vmul.f32 %v99, %v99
    %v120 = vadd.f32 %v100, %v105
    %v121 = vadd.f32 %v120, %v110
    %v122 = vadd.f32 %v121, %v115
    %v123 = vrot.slane %v122, 4
    %v124 = vadd.f32 %v122, %v123
    %v125 = vrot.slane %v124, 2
    %v126 = vadd.f32 %v124, %v125
    %v127 = vrot.slane %v126, 1
    %v128 = vadd.f32 %v126, %v127
    %v129 = vadd.f32 %v101, %v106
    %v130 = vadd.f32 %v129, %v111
    %v131 = vadd.f32 %v130, %v116
    %v132 = vrot.slane %v131, 4
    %v133 = vadd.f32 %v131, %v132
    %v134 = vrot.slane %v133, 2
    %v135 = vadd.f32 %v133, %v134
    %v136 = vrot.slane %v135, 1
    %v137 = vadd.f32 %v135, %v136
    %v138 = vadd.f32 %v102, %v107
    %v139 = vadd.f32 %v138, %v112
    %v140 = vadd.f32 %v139, %v117
    %v141 = vrot.slane %v140, 4
    %v142 = vadd.f32 %v140, %v141
    %v143 = vrot.slane %v142, 2
    %v144 = vadd.f32 %v142, %v143
    %v145 = vrot.slane %v144, 1
    %v146 = vadd.f32 %v144, %v145
    %v147 = vadd.f32 %v103, %v108
    %v148 = vadd.f32 %v147, %v113
    %v149 = vadd.f32 %v148, %v118
    %v150 = vrot.slane %v149, 4
    %v151 = vadd.f32 %v149, %v150
    %v152 = vrot.slane %v151, 2
    %v153 = vadd.f32 %v151, %v152
    %v154 = vrot.slane %v153, 1
    %v155 = vadd.f32 %v153, %v154
    %v156 = vadd.f32 %v104, %v109
    %v157 = vadd.f32 %v156, %v114
    %v158 = vadd.f32 %v157, %v119
    %v159 = vrot.slane %v158, 4
    %v160 = vadd.f32 %v158, %v159
    %v161 = vrot.slane %v160, 2
    %v162 = vadd.f32 %v160, %v161
    %v163 = vrot.slane %v162, 1
    %v164 = vadd.f32 %v162, %v163
    %v165 = vmax.f32 %v128, 1e-24
    %v166 = vmax.f32 %v137, 1e-24
    %v167 = vmax.f32 %v146, 1e-24
    %v168 = vmax.f32 %v155, 1e-24
    %v169 = vmax.f32 %v164, 1e-24
    %v170 = vrsqrt.pop %v165
    %v171 = vmul.f32 %v170, %v165
    %v172 = vmul.f32 %v171, %v170
    %v173 = vmul.f32 0.5, %v172
    %v174 = vsub.f32 1.5, %v173
    %v175 = vmul.f32 %v170, %v174
    %vm176 = vweird.f32 %v165
    %vm177 = vweird.f32 %v170
    %vm178 = vmor %vm176, %vm177
    %v179 = vsel %vm178, %v170, %v175
    %v180 = vrsqrt.pop %v166
    %v181 = vmul.f32 %v180, %v166
    %v182 = vmul.f32 %v181, %v180
    %v183 = vmul.f32 0.5, %v182
    %v184 = vsub.f32 1.5, %v183
    %v185 = vmul.f32 %v180, %v184
    %vm186 = vweird.f32 %v166
    %vm187 = vweird.f32 %v180
    %vm188 = vmor %vm186, %vm187
    %v189 = vsel %vm188, %v180, %v185
    %v190 = vrsqrt.pop %v167
    %v191 = vmul.f32 %v190, %v167
    %v192 = vmul.f32 %v191, %v190
    %v193 = vmul.f32 0.5, %v192
    %v194 = vsub.f32 1.5, %v193
    %v195 = vmul.f32 %v190, %v194
    %vm196 = vweird.f32 %v167
    %vm197 = vweird.f32 %v190
    %vm198 = vmor %vm196, %vm197
    %v199 = vsel %vm198, %v190, %v195
    %v200 = vrsqrt.pop %v168
    %v201 = vmul.f32 %v200, %v168
    %v202 = vmul.f32 %v201, %v200
    %v203 = vmul.f32 0.5, %v202
    %v204 = vsub.f32 1.5, %v203
    %v205 = vmul.f32 %v200, %v204
    %vm206 = vweird.f32 %v168
    %vm207 = vweird.f32 %v200
    %vm208 = vmor %vm206, %vm207
    %v209 = vsel %vm208, %v200, %v205
    %v210 = vrsqrt.pop %v169
    %v211 = vmul.f32 %v210, %v169
    %v212 = vmul.f32 %v211, %v210
    %v213 = vmul.f32 0.5, %v212
    %v214 = vsub.f32 1.5, %v213
    %v215 = vmul.f32 %v210, %v214
    %vm216 = vweird.f32 %v169
    %vm217 = vweird.f32 %v210
    %vm218 = vmor %vm216, %vm217
    %v219 = vsel %vm218, %v210, %v215
    %v220 = vmul.f32 %v80, %v179
    %v221 = vmul.f32 %v81, %v189
    %v222 = vmul.f32 %v82, %v199
    %v223 = vmul.f32 %v83, %v209
    %v224 = vmul.f32 %v84, %v219
    %v225 = vmul.f32 %v85, %v179
    %v226 = vmul.f32 %v86, %v189
    %v227 = vmul.f32 %v87, %v199
    %v228 = vmul.f32 %v88, %v209
    %v229 = vmul.f32 %v89, %v219
    %v230 = vmul.f32 %v90, %v179
    %v231 = vmul.f32 %v91, %v189
    %v232 = vmul.f32 %v92, %v199
    %v233 = vmul.f32 %v93, %v209
    %v234 = vmul.f32 %v94, %v219
    %v235 = vmul.f32 %v95, %v179
    %v236 = vmul.f32 %v96, %v189
    %v237 = vmul.f32 %v97, %v199
    %v238 = vmul.f32 %v98, %v209
    %v239 = vmul.f32 %v99, %v219
    %v240 = vld [vmem:[#allocation2] sm:$0xff]
    %vm241 = vcmask 261120
    %v243 = vsel %vm241, %v240, 0
    %245 = vmatpush.msra.mxu0 0.0
    %246 = vmatpush.msra.mxu0 0.0
    %247 = vmatpush.msra.mxu0 0.0
    %248 = vmatpush.msra.mxu0 0.0
    %249 = vmatpush.msra.mxu0 0.0
    %250 = vmatpush.msra.mxu0 0.0
    %251 = vmatpush.msra.mxu0 0.0
    %252 = vmatpush.msra.mxu0 0.0
    %253 = vmatpush.msra.mxu0 0.0
    %254 = vmatpush.msra.mxu0 0.0
    %255 = vmatpush.msra.mxu0 0.0
    %256 = vmatpush.msra.mxu0 0.0
    %257 = vmatpush.msra.mxu0 %v235
    %258 = vmatpush.msra.mxu0 %v230
    %259 = vmatpush.msra.mxu0 %v225
    %260 = vmatpush.msra.mxu0 %v220
    %261 = vmatmul.f32.gmra.mxu0 %v243
    %v262 = vpop.f32.mrf.mxu0
    %v263 = vadd.f32 0.0, %v262
    %264 = vdwg.mxu0
    %265 = vmatpush.msra.mxu0 0.0
    %266 = vmatpush.msra.mxu0 0.0
    %267 = vmatpush.msra.mxu0 0.0
    %268 = vmatpush.msra.mxu0 0.0
    %269 = vmatpush.msra.mxu0 0.0
    %270 = vmatpush.msra.mxu0 0.0
    %271 = vmatpush.msra.mxu0 0.0
    %272 = vmatpush.msra.mxu0 0.0
    %273 = vmatpush.msra.mxu0 0.0
    %274 = vmatpush.msra.mxu0 0.0
    %275 = vmatpush.msra.mxu0 0.0
    %276 = vmatpush.msra.mxu0 0.0
    %277 = vmatpush.msra.mxu0 %v236
    %278 = vmatpush.msra.mxu0 %v231
    %279 = vmatpush.msra.mxu0 %v226
    %280 = vmatpush.msra.mxu0 %v221
    %281 = vmatmul.f32.gmra.mxu0 %v243
    %v282 = vpop.f32.mrf.mxu0
    %v283 = vadd.f32 0.0, %v282
    %284 = vdwg.mxu0
    %285 = vmatpush.msra.mxu0 0.0
    %286 = vmatpush.msra.mxu0 0.0
    %287 = vmatpush.msra.mxu0 0.0
    %288 = vmatpush.msra.mxu0 0.0
    %289 = vmatpush.msra.mxu0 0.0
    %290 = vmatpush.msra.mxu0 0.0
    %291 = vmatpush.msra.mxu0 0.0
    %292 = vmatpush.msra.mxu0 0.0
    %293 = vmatpush.msra.mxu0 0.0
    %294 = vmatpush.msra.mxu0 0.0
    %295 = vmatpush.msra.mxu0 0.0
    %296 = vmatpush.msra.mxu0 0.0
    %297 = vmatpush.msra.mxu0 %v237
    %298 = vmatpush.msra.mxu0 %v232
    %299 = vmatpush.msra.mxu0 %v227
    %300 = vmatpush.msra.mxu0 %v222
    %301 = vmatmul.f32.gmra.mxu0 %v243
    %v302 = vpop.f32.mrf.mxu0
    %v303 = vadd.f32 0.0, %v302
    %304 = vdwg.mxu0
    %305 = vmatpush.msra.mxu0 0.0
    %306 = vmatpush.msra.mxu0 0.0
    %307 = vmatpush.msra.mxu0 0.0
    %308 = vmatpush.msra.mxu0 0.0
    %309 = vmatpush.msra.mxu0 0.0
    %310 = vmatpush.msra.mxu0 0.0
    %311 = vmatpush.msra.mxu0 0.0
    %312 = vmatpush.msra.mxu0 0.0
    %313 = vmatpush.msra.mxu0 0.0
    %314 = vmatpush.msra.mxu0 0.0
    %315 = vmatpush.msra.mxu0 0.0
    %316 = vmatpush.msra.mxu0 0.0
    %317 = vmatpush.msra.mxu0 %v238
    %318 = vmatpush.msra.mxu0 %v233
    %319 = vmatpush.msra.mxu0 %v228
    %320 = vmatpush.msra.mxu0 %v223
    %321 = vmatmul.f32.gmra.mxu0 %v243
    %v322 = vpop.f32.mrf.mxu0
    %v323 = vadd.f32 0.0, %v322
    %324 = vdwg.mxu0
    %325 = vmatpush.msra.mxu0 0.0
    %326 = vmatpush.msra.mxu0 0.0
    %327 = vmatpush.msra.mxu0 0.0
    %328 = vmatpush.msra.mxu0 0.0
    %329 = vmatpush.msra.mxu0 0.0
    %330 = vmatpush.msra.mxu0 0.0
    %331 = vmatpush.msra.mxu0 0.0
    %332 = vmatpush.msra.mxu0 0.0
    %333 = vmatpush.msra.mxu0 0.0
    %334 = vmatpush.msra.mxu0 0.0
    %335 = vmatpush.msra.mxu0 0.0
    %336 = vmatpush.msra.mxu0 0.0
    %337 = vmatpush.msra.mxu0 %v239
    %338 = vmatpush.msra.mxu0 %v234
    %339 = vmatpush.msra.mxu0 %v229
    %340 = vmatpush.msra.mxu0 %v224
    %341 = vmatmul.f32.gmra.mxu0 %v243
    %v342 = vpop.f32.mrf.mxu0
    %v343 = vadd.f32 0.0, %v342
    %344 = vdwg.mxu0
    %v345 = vrot.slane %v263, 4
    %v346 = vmax.f32 %v263, %v345
    %v347 = vrot.slane %v346, 2
    %v348 = vmax.f32 %v346, %v347
    %v349 = vrot.slane %v348, 1
    %v350 = vmax.f32 %v348, %v349
    %v351 = vrot.slane %v283, 4
    %v352 = vmax.f32 %v283, %v351
    %v353 = vrot.slane %v352, 2
    %v354 = vmax.f32 %v352, %v353
    %v355 = vrot.slane %v354, 1
    %v356 = vmax.f32 %v354, %v355
    %v357 = vrot.slane %v303, 4
    %v358 = vmax.f32 %v303, %v357
    %v359 = vrot.slane %v358, 2
    %v360 = vmax.f32 %v358, %v359
    %v361 = vrot.slane %v360, 1
    %v362 = vmax.f32 %v360, %v361
    %v363 = vrot.slane %v323, 4
    %v364 = vmax.f32 %v323, %v363
    %v365 = vrot.slane %v364, 2
    %v366 = vmax.f32 %v364, %v365
    %v367 = vrot.slane %v366, 1
    %v368 = vmax.f32 %v366, %v367
    %v369 = vrot.slane %v343, 4
    %v370 = vmax.f32 %v343, %v369
    %v371 = vrot.slane %v370, 2
    %v372 = vmax.f32 %v370, %v371
    %v373 = vrot.slane %v372, 1
    %v374 = vmax.f32 %v372, %v373
    %v375 = vmul.f32 %v350, 1.442695
    %v376 = vpow.pop %v375
    %v377 = vmul.f32 %v356, 1.442695
    %v378 = vpow.pop %v377
    %v379 = vmul.f32 %v362, 1.442695
    %v380 = vpow.pop %v379
    %v381 = vmul.f32 %v368, 1.442695
    %v382 = vpow.pop %v381
    %v383 = vmul.f32 %v374, 1.442695
    %v384 = vpow.pop %v383
    %s385 = sadd.s32 0, 0
    %s386 = smul.u32 %s385, 640
    %v387 = vlaneseq
    %v388 = vand.u32 %v387, 127
    %v389 = vadd.s32 %v388, 128
    %v390 = vadd.s32 %v388, 256
    %v391 = vadd.s32 %v388, 384
    %v392 = vadd.s32 %v388, 512
    %v393 = vstv %s386
    %v394 = vadd.s32 %v393, %v388
    %v395 = vadd.s32 %v393, %v389
    %v396 = vadd.s32 %v393, %v390
    %v397 = vadd.s32 %v393, %v391
    %v398 = vadd.s32 %v393, %v392
    %vm399 = vcmp.lt.s32.totalorder %v394, 520
    %vm400 = vcmp.lt.s32.totalorder %v395, 520
    %vm401 = vcmp.lt.s32.totalorder %v396, 520
    %vm402 = vcmp.lt.s32.totalorder %v397, 520
    %vm403 = vcmp.lt.s32.totalorder %v398, 520
    %v404 = vsel %vm399, %v376, 0.0
    %v405 = vsel %vm400, %v378, 0.0
    %v406 = vsel %vm401, %v380, 0.0
    %v407 = vsel %vm402, %v382, 0.0
    %v408 = vsel %vm403, %v384, 0.0
    %v409 = vld [vmem:[#allocation7] sm:$0xff]
    %v410 = vld [vmem:[#allocation7 + $0x8] sm:$0x3]
    %v411 = vunpack.c.0.s8 %v409
    %v412 = vunpack.c.1.s8 %v409
    %v413 = vunpack.c.2.s8 %v409
    %v414 = vunpack.c.3.s8 %v409
    %v415 = vunpack.c.0.s8 %v410
    %v416 = vcvt.s32.f32 %v411
    %v417 = vcvt.s32.f32 %v412
    %v418 = vcvt.s32.f32 %v413
    %v419 = vcvt.s32.f32 %v414
    %v420 = vcvt.s32.f32 %v415
    %v421 = vmul.f32 %v416, %v404
    %v422 = vmul.f32 %v417, %v405
    %v423 = vmul.f32 %v418, %v406
    %v424 = vmul.f32 %v419, %v407
    %v425 = vmul.f32 %v420, %v408
    %v426 = vadd.f32 %v421, %v422
    %v427 = vadd.f32 %v426, %v423
    %v428 = vadd.f32 %v427, %v424
    %v429 = vadd.f32 %v428, %v425
    %430 = vadd.xlane.f32.xlu0 %v429
    %v431 = vpop.xlane.xlu0 %430
    %v432 = vadd.f32 %v404, %v405
    %v433 = vadd.f32 %v432, %v406
    %v434 = vadd.f32 %v433, %v407
    %v435 = vadd.f32 %v434, %v408
    %436 = vadd.xlane.f32.xlu0 %v435
    %v437 = vpop.xlane.xlu0 %436
    %v438 = vld [vmem:[%s3] sm:$0xff]
    %v439 = vadd.f32 %v438, %v431
    %vm440 = vcmask 7168
    %441 = vst.msk [vmem:[%s3] sm:$0xff] %vm440, %v439
    %v442 = vld [vmem:[#allocation8] sm:$0x1]
    %v443 = vadd.f32 %v442, %v437
    %vm444 = vcmask 0
    %445 = vst.msk [vmem:[#allocation8] sm:$0x1] %vm444, %v443
    // Predicated region
    $region30: #{tpu_custom_call.1} parent=1 // pred_check
      _
    $region31: #{tpu_custom_call.1} parent=1 // pred_check_branch
      %447 = sbr.rel (0) target = $region33
    $region32: #{tpu_custom_call.1} parent=1 // pred_region
      _
    $region33: #{tpu_custom_call.1} parent=1 // pred_fallthru
      _
    // Predicated region
    $region34: #{tpu_custom_call.1} parent=1 // pred_check
      _
    $region35: #{tpu_custom_call.1} parent=1 // pred_check_branch
      %449 = sbr.rel (0) target = $region37
    $region36: #{tpu_custom_call.1} parent=1 // pred_region
      %451 = vsyncadd [#allocation4], 0
      %s453 = sshll.u32 [#allocation8], 4
      %s454 = int_to_ptr.vmem [resolvable:$true] %s453
      %s455 = sshll.u32 %s4, 4
      %s456 = int_to_ptr.hbm [resolvable:$true] %s455
      %458 = dma.vmem_to_hbm [thread:$0]  %s454, 16, %s456, [#allocation4]
    $region37: #{tpu_custom_call.1} parent=1 // pred_fallthru
      _
    // Predicated region
    $region38: #{tpu_custom_call.1} parent=1 // pred_check
      _
    $region39: #{tpu_custom_call.1} parent=1 // pred_check_branch
      %460 = sbr.rel (0) target = $region41
    $region40: #{tpu_custom_call.1} parent=1 // pred_region
      _
    $region41: #{tpu_custom_call.1} parent=1 // pred_fallthru
      _
    // Predicated region
    $region42: #{tpu_custom_call.1} parent=1 // pred_check
      _
    $region43: #{tpu_custom_call.1} parent=1 // pred_check_branch
      %462 = sbr.rel (0) target = $region45
    $region44: #{tpu_custom_call.1} parent=1 // pred_region
      %464 = dma.done [#allocation4], 16
    $region45: #{tpu_custom_call.1} parent=1 // pred_fallthru
      _
    %465 = vsyncpa [#allocation3], 1
    %466 = vsyncpa [#allocation6], 1
    %467 = vsyncpa [#allocation4], 1

</llo_original>
